<compile_context>
chip_gen: v7x
topology: tpu7x:2x2x1
jax: 0.10.0
libtpu: 0.0.40
codegen_flags: <defaults>
</compile_context>

<pallas_src>
import functools

import jax
import jax.numpy as jnp
from jax.experimental import pallas as pl
from jax.experimental.pallas import tpu as pltpu


def _round_up(n, m):
    return ((n + m - 1) // m) * m


def _cdiv(a, b):
    return -(-a // b)


def _vmem_limit_bytes():
    """Generation-aware scoped-VMEM budget (96 MiB on 128 MiB parts, 3/4 on v7x)."""
    try:
        cap = int(getattr(pltpu.get_tpu_info(), "vmem_capacity_bytes", 128 << 20))
    except Exception:
        cap = 128 << 20
    if cap >= (128 << 20):
        return 96 << 20
    return (cap * 3) // 4


# --------------------------------------------------------------------------- #
# One-time parameter fusion (hoisted out of the per-call path).
# --------------------------------------------------------------------------- #
def fuse_pec_params(student_params, teacher_params):
    """Fuse student & teacher weights into the single-matmul-per-layer form.

    Returns a dict of device arrays; compute ONCE and reuse across forward calls.
      w1 : [D_in, 2H]      bf16   concat(student_w1, teacher_w1)
      b1 : [1, 2H]         f32    concat(student_b1, teacher_b1)
      w2 : [2H, D_out_pad] bf16   concat(student_w2, -teacher_w2), zero-padded lanes
      b2 : [1, D_out_pad]  f32    student_b2 - teacher_b2, zero-padded lanes
    """
    w1s, b1s, w2s, b2s = student_params
    w1t, b1t, w2t, b2t = teacher_params

    def as_row(b):  # accept PyTorch-style 1-D biases or (1, H)
        return jnp.asarray(b).reshape(1, -1)

    d_out = w2s.shape[1]
    d_out_pad = _round_up(d_out, 128)          # lane-dense epilogue (esp. v5e)

    w1 = jnp.concatenate([w1s, w1t], axis=1).astype(jnp.bfloat16)          # [D_in, 2H]
    b1 = jnp.concatenate([as_row(b1s), as_row(b1t)], axis=1).astype(jnp.float32)
    w2 = jnp.concatenate([w2s, -w2t], axis=0).astype(jnp.bfloat16)         # [2H, D_out]
    b2 = (as_row(b2s) - as_row(b2t)).astype(jnp.float32)                   # [1, D_out]
    if d_out_pad != d_out:
        w2 = jnp.pad(w2, ((0, 0), (0, d_out_pad - d_out)))
        b2 = jnp.pad(b2, ((0, 0), (0, d_out_pad - d_out)))

    return {"w1": w1, "b1": b1, "w2": w2, "b2": b2, "d_out": d_out}


# --------------------------------------------------------------------------- #
# Kernel
# --------------------------------------------------------------------------- #
def _pec_pair_kernel(x_ref, w1_ref, b1_ref, w2_ref, b2_ref, out_ref, *, inv_d_out):
    """Fused student/teacher forward + per-sample MSE for one batch tile.

    x_ref  : [TB, D_in]       f32 (cast to bf16 in VMEM)
    w1_ref : [D_in, 2H]       bf16
    b1_ref : [1, 2H]          f32
    w2_ref : [2H, D_out_pad]  bf16  (teacher half pre-negated, lanes zero-padded)
    b2_ref : [1, D_out_pad]   f32
    out_ref: [TB, 1]          f32   mean((student - teacher)^2, axis=1)
    """
    xb = x_ref[...].astype(jnp.bfloat16)                   # in-VMEM cast (VPU)

    # Layer 1: one wide matmul covers both branches (MXU, f32 accumulation).
    h = jnp.dot(xb, w1_ref[...], preferred_element_type=jnp.float32)
    h = jnp.maximum(h + b1_ref[...], 0.0)                   # ReLU in f32

    # Layer 2: teacher rows pre-negated -> d = student(x) - teacher(x) directly.
    d = jnp.dot(h.astype(jnp.bfloat16), w2_ref[...],
                preferred_element_type=jnp.float32) + b2_ref[...]

    # Padded D_out columns are exactly zero, so sum * (1/d_out) == mean over d_out.
    out_ref[...] = jnp.sum(d * d, axis=1, keepdims=True) * inv_d_out


# --------------------------------------------------------------------------- #
# Tile selection
# --------------------------------------------------------------------------- #
def _pick_tile(B, d_in, two_h, d_out_pad, x_itemsize, vmem_budget):
    """Batch-tile rows: multiple of 16, <=1024, aims for an even tile count >= 2
    (v7x TC split), and fits the double-buffered x tile + intermediates in VMEM."""
    # Resident weights (worst case double-buffered by the pipeline).
    w_bytes = 2 * (d_in * two_h * 2 + two_h * d_out_pad * 2
                   + two_h * 4 + d_out_pad * 4)
    avail = max(vmem_budget - w_bytes, 1 << 20)
    # Per-row VMEM: x tile (2 buffers) + bf16 copy + f32/bf16 hidden + f32 diff.
    per_row = (2 * d_in * x_itemsize + 2 * d_in
               + 6 * two_h + 4 * d_out_pad + 16)
    cap = max(16, (avail // per_row) // 16 * 16)

    target = max(16, _round_up(_cdiv(B, 2), 16))   # >=2 tiles when B allows
    return int(min(target, cap, 1024))


# --------------------------------------------------------------------------- #
# Forward wrapper
# --------------------------------------------------------------------------- #
def pec_student_teacher_pair(x_nchw, fused):
    """mean((student(x) - teacher(x))**2, dim=1) using the pre-fused params."""
    B = x_nchw.shape[0]
    x = x_nchw.reshape(B, -1)                       # contiguous view, no copy
    d_in = x.shape[1]

    w1, b1, w2, b2 = fused["w1"], fused["b1"], fused["w2"], fused["b2"]
    two_h = w1.shape[1]
    d_out_pad = w2.shape[1]
    inv_d_out = 1.0 / float(fused["d_out"])

    x_itemsize = jnp.dtype(x.dtype).itemsize
    tb = _pick_tile(B, d_in, two_h, d_out_pad, x_itemsize, _vmem_limit_bytes())
    n_tiles = _cdiv(B, tb)   # ragged / overhung last tile is masked by Pallas

    kernel = functools.partial(_pec_pair_kernel, inv_d_out=inv_d_out)

    out = pl.pallas_call(
        kernel,
        out_shape=jax.ShapeDtypeStruct((B, 1), jnp.float32),
        grid=(n_tiles,),
        in_specs=[
            pl.BlockSpec((tb, d_in), lambda i: (i, 0)),       # batch-tiled input
            pl.BlockSpec((d_in, two_h), lambda i: (0, 0)),    # VMEM-resident weights
            pl.BlockSpec((1, two_h), lambda i: (0, 0)),
            pl.BlockSpec((two_h, d_out_pad), lambda i: (0, 0)),
            pl.BlockSpec((1, d_out_pad), lambda i: (0, 0)),
        ],
        out_specs=pl.BlockSpec((tb, 1), lambda i: (i, 0)),
        compiler_params=pltpu.CompilerParams(
            dimension_semantics=("parallel",),
            vmem_limit_bytes=_vmem_limit_bytes(),
        ),
    )(x, w1, b1, w2, b2)

    return out[:, 0]                                          # [B]


# --------------------------------------------------------------------------- #
# Test scaffolding
# --------------------------------------------------------------------------- #
def _init_mlp_params(key, d_in, hid, d_out):
    """Deterministic (PyTorch-Linear-like uniform) init for one 2-layer MLP."""
    k1, k2, k3, k4 = jax.random.split(key, 4)
    lim1 = 1.0 / jnp.sqrt(d_in)
    lim2 = 1.0 / jnp.sqrt(hid)
    w1 = jax.random.uniform(k1, (d_in, hid), jnp.float32, -lim1, lim1)
    b1 = jax.random.uniform(k2, (hid,), jnp.float32, -lim1, lim1)       # 1-D like PyTorch
    w2 = jax.random.uniform(k3, (hid, d_out), jnp.float32, -lim2, lim2)
    b2 = jax.random.uniform(k4, (d_out,), jnp.float32, -lim2, lim2)
    return (w1, b1, w2, b2)


def _reference(x_nchw, student_params, teacher_params):
    """Pure-JAX f32 reference for correctness checking."""
    B = x_nchw.shape[0]
    x = x_nchw.reshape(B, -1).astype(jnp.float32)

    def mlp(p):
        w1, b1, w2, b2 = p
        h = jnp.maximum(x @ w1 + b1.reshape(1, -1), 0.0)
        return h @ w2 + b2.reshape(1, -1)

    d = mlp(student_params) - mlp(teacher_params)
    return jnp.mean(d * d, axis=1)


if __name__ == "__main__":
    # Small shapes consistent with the module: NCHW image input.
    B, C, H, W = 2, 4, 16, 16
    D_IN = C * H * W          # 1024
    HID = 128
    D_OUT = 64

    key = jax.random.PRNGKey(0)
    kx, ks, kt = jax.random.split(key, 3)

    x = jax.random.normal(kx, (B, C, H, W), jnp.float32)
    student_params = _init_mlp_params(ks, D_IN, HID, D_OUT)
    teacher_params = _init_mlp_params(kt, D_IN, HID, D_OUT)

    # Fuse once; reuse across all forward calls (weights don't change per call).
    fused = fuse_pec_params(student_params, teacher_params)
    fused = jax.tree_util.tree_map(
        lambda a: jax.block_until_ready(a) if isinstance(a, jax.Array) else a, fused)

    out = pec_student_teacher_pair(x, fused)
    out = jax.block_until_ready(out)

    ref = _reference(x, student_params, teacher_params)
    assert out.shape == (B,)
    # bf16 matmuls (f32 accumulation) -> loosened tolerance vs the f32 reference.
    assert jnp.allclose(out, ref, rtol=5e-2, atol=1e-3), (out, ref)

    print("KERNEL_OK")
</pallas_src>

<mosaic_0001>
module attributes {stable_mosaic.version = 11 : i64} {
  func.func @_pec_pair_kernel(%arg0: i32, %arg1: memref<16x1024xf32, #tpu.memory_space<vmem>>, %arg2: memref<1024x256xbf16, #tpu.memory_space<vmem>>, %arg3: memref<1x256xf32, #tpu.memory_space<vmem>>, %arg4: memref<256x128xbf16, #tpu.memory_space<vmem>>, %arg5: memref<1x128xf32, #tpu.memory_space<vmem>>, %arg6: memref<16x1xf32, #tpu.memory_space<vmem>>) attributes {dimension_semantics = [#tpu.dimension_semantics<parallel>], iteration_bounds = array<i64: 1>, scalar_prefetch = 0 : i64, scratch_operands = 0 : i64, tpu.core_type = #tpu.core_type<tc>, window_params = [{transform_indices = @transform_0, window_bounds = array<i64: 16, 1024>}, {pipeline_mode = #tpu.pipeline_mode<synchronous>, transform_indices = @transform_1, window_bounds = array<i64: 1024, 256>}, {pipeline_mode = #tpu.pipeline_mode<synchronous>, transform_indices = @transform_2, window_bounds = array<i64: 1, 256>}, {pipeline_mode = #tpu.pipeline_mode<synchronous>, transform_indices = @transform_3, window_bounds = array<i64: 256, 128>}, {pipeline_mode = #tpu.pipeline_mode<synchronous>, transform_indices = @transform_4, window_bounds = array<i64: 1, 128>}, {transform_indices = @transform_5, window_bounds = array<i64: 16, 1>}]} {
    %c0 = arith.constant 0 : index
    %c0_0 = arith.constant 0 : index
    %0 = vector.load %arg1[%c0, %c0_0] : memref<16x1024xf32, #tpu.memory_space<vmem>>, vector<16x1024xf32>
    %1 = arith.truncf %0 : vector<16x1024xf32> to vector<16x1024xbf16>
    %c0_1 = arith.constant 0 : index
    %c0_2 = arith.constant 0 : index
    %2 = vector.load %arg2[%c0_1, %c0_2] : memref<1024x256xbf16, #tpu.memory_space<vmem>>, vector<1024x256xbf16>
    %cst = arith.constant dense<0.000000e+00> : vector<16x256xf32>
    %3 = tpu.matmul %1, %2, %cst {dimension_numbers = #tpu.dot_dimension_numbers<[1], [0], [0], [1], [0, 0, 1, 1], [], []>} : vector<16x1024xbf16>, vector<1024x256xbf16>, vector<16x256xf32> -> vector<16x256xf32>
    %c0_3 = arith.constant 0 : index
    %c0_4 = arith.constant 0 : index
    %4 = vector.load %arg3[%c0_3, %c0_4] : memref<1x256xf32, #tpu.memory_space<vmem>>, vector<1x256xf32>
    %5 = vector.broadcast %4 : vector<1x256xf32> to vector<16x256xf32>
    %6 = arith.addf %3, %5 : vector<16x256xf32>
    %cst_5 = arith.constant 0.000000e+00 : f32
    %7 = vector.broadcast %cst_5 : f32 to vector<16x256xf32>
    %8 = arith.maximumf %6, %7 : vector<16x256xf32>
    %9 = arith.truncf %8 : vector<16x256xf32> to vector<16x256xbf16>
    %c0_6 = arith.constant 0 : index
    %c0_7 = arith.constant 0 : index
    %10 = vector.load %arg4[%c0_6, %c0_7] : memref<256x128xbf16, #tpu.memory_space<vmem>>, vector<256x128xbf16>
    %cst_8 = arith.constant dense<0.000000e+00> : vector<16x128xf32>
    %11 = tpu.matmul %9, %10, %cst_8 {dimension_numbers = #tpu.dot_dimension_numbers<[1], [0], [0], [1], [0, 0, 1, 1], [], []>} : vector<16x256xbf16>, vector<256x128xbf16>, vector<16x128xf32> -> vector<16x128xf32>
    %c0_9 = arith.constant 0 : index
    %c0_10 = arith.constant 0 : index
    %12 = vector.load %arg5[%c0_9, %c0_10] : memref<1x128xf32, #tpu.memory_space<vmem>>, vector<1x128xf32>
    %13 = vector.broadcast %12 : vector<1x128xf32> to vector<16x128xf32>
    %14 = arith.addf %11, %13 : vector<16x128xf32>
    %15 = arith.mulf %14, %14 : vector<16x128xf32>
    %cst_11 = arith.constant dense<0.000000e+00> : vector<16xf32>
    %16 = vector.multi_reduction <add>, %15, %cst_11 [1] : vector<16x128xf32> to vector<16xf32>
    %17 = vector.shape_cast %16 : vector<16xf32> to vector<16x1xf32>
    %cst_12 = arith.constant 1.562500e-02 : f32
    %18 = vector.broadcast %cst_12 : f32 to vector<16x1xf32>
    %19 = arith.mulf %17, %18 : vector<16x1xf32>
    %c0_13 = arith.constant 0 : index
    %c0_14 = arith.constant 0 : index
    %20 = vector.load %arg6[%c0_13, %c0_14] : memref<16x1xf32, #tpu.memory_space<vmem>>, vector<16x1xf32>
    tpu.vector_store %arg6[%c0_13, %c0_14], %19 {strides = array<i32>} : memref<16x1xf32, #tpu.memory_space<vmem>>, vector<16x1xf32>,
    return
  }
  func.func @transform_0(%arg0: i32) -> (i32, i32) {
    %c0_i32 = arith.constant 0 : i32
    %c0_i32_0 = arith.constant 0 : i32
    return %arg0, %c0_i32 : i32, i32
  }
  func.func @transform_1(%arg0: i32) -> (i32, i32) {
    %c0_i32 = arith.constant 0 : i32
    %c0_i32_0 = arith.constant 0 : i32
    %c0_i32_1 = arith.constant 0 : i32
    return %c0_i32, %c0_i32_0 : i32, i32
  }
  func.func @transform_2(%arg0: i32) -> (i32, i32) {
    %c0_i32 = arith.constant 0 : i32
    %c0_i32_0 = arith.constant 0 : i32
    %c0_i32_1 = arith.constant 0 : i32
    return %c0_i32, %c0_i32_0 : i32, i32
  }
  func.func @transform_3(%arg0: i32) -> (i32, i32) {
    %c0_i32 = arith.constant 0 : i32
    %c0_i32_0 = arith.constant 0 : i32
    %c0_i32_1 = arith.constant 0 : i32
    return %c0_i32, %c0_i32_0 : i32, i32
  }
  func.func @transform_4(%arg0: i32) -> (i32, i32) {
    %c0_i32 = arith.constant 0 : i32
    %c0_i32_0 = arith.constant 0 : i32
    %c0_i32_1 = arith.constant 0 : i32
    return %c0_i32, %c0_i32_0 : i32, i32
  }
  func.func @transform_5(%arg0: i32) -> (i32, i32) {
    %c0_i32 = arith.constant 0 : i32
    %c0_i32_0 = arith.constant 0 : i32
    return %arg0, %c0_i32 : i32, i32
  }
}

</mosaic_0001>

<llo_original>
// kernel: tpu_custom_call.1
$region0: #{tpu_custom_call.1}
  #allocation0 [shape = 'u32[]', space=smem, size = 0x4, offset = 0x4, fixed_abs, tag = 'smem constant byte address 0x4 - core index']
  #allocation1 [shape = 'u32[144,128]{1,0:T(1,128)}', space=vmem, size = 0x12000, scoped, tag = 'internal scratch']
  %s0 = inlined_call_operand.hbm [shape: f32[2,1024], index: 0, kind: input, shape index: {}]
  %s1 = inlined_call_operand.hbm [shape: bf16[1024,256], index: 1, kind: input, shape index: {}]
  %s2 = inlined_call_operand.hbm [shape: f32[1,256], index: 2, kind: input, shape index: {}]
  %s3 = inlined_call_operand.hbm [shape: bf16[256,128], index: 3, kind: input, shape index: {}]
  %s4 = inlined_call_operand.hbm [shape: f32[1,128], index: 4, kind: input, shape index: {}]
  %s5 = inlined_call_operand.hbm [shape: f32[2,1], index: 5, kind: output, shape index: {}]
  %s6 = sld [smem:[#allocation0]]
  $region50: #{tpu_custom_call.1} parent=0
    _
  %s8 = ssub.s32 1, %s6
  %s9 = scalar_select 0, %s8, %s6
  $region1: #{tpu_custom_call.1} parent=0
    #allocation2 [shape = 'u8[65536]{0}', space=vmem, size = 0x10000, scoped, tag = 'input window, operand 0, single buffered']
    #allocation3 [shape = 's32[1]{0}', space=sflag, size = 0x4, scoped, tag = 'scoped memory for tpu_custom_call.1']
    #allocation4 [shape = 's32[1]{0}', space=sflag, size = 0x4, scoped, tag = 'scoped memory for tpu_custom_call.1']
    #allocation5 [shape = 'u8[524288]{0}', space=vmem, size = 0x80000, scoped, tag = 'input window, operand 1, single buffered']
    #allocation6 [shape = 's32[1]{0}', space=sflag, size = 0x4, scoped, tag = 'scoped memory for tpu_custom_call.1']
    #allocation7 [shape = 'u8[1024]{0}', space=vmem, size = 0x400, scoped, tag = 'input window, operand 2, single buffered']
    #allocation8 [shape = 'u8[65536]{0}', space=vmem, size = 0x10000, scoped, tag = 'input window, operand 3, single buffered']
    #allocation9 [shape = 's32[1]{0}', space=sflag, size = 0x4, scoped, tag = 'scoped memory for tpu_custom_call.1']
    #allocation10 [shape = 'u8[512]{0}', space=vmem, size = 0x400, scoped, tag = 'input window, operand 4, single buffered']
    #allocation11 [shape = 'u8[8192]{0}', space=vmem, size = 0x2000, scoped, tag = 'output window, operand 0, single buffered']
    %10 = vsyncpa [#allocation3], 0
    %11 = vsyncpa [#allocation6], 0
    %12 = vsyncpa [#allocation9], 0
    %13 = vsyncpa [#allocation4], 0
    // Predicated region
    $region2: #{tpu_custom_call.1} parent=1 // pred_check
      _
    $region3: #{tpu_custom_call.1} parent=1 // pred_check_branch
      %15 = sbr.rel (0) target = $region5
    $region4: #{tpu_custom_call.1} parent=1 // pred_region
      %s17 = ssub.s32 2048, 256
      %18 = vsyncadd [#allocation3], %s17
      %s19 = sshll.u32 [#allocation2], 4
      %s20 = int_to_ptr.vmem [resolvable:$true] %s19
      %25 = dma.hbm_to_vmem [thread:$0]  %s0, 256, %s20, [#allocation3], 256, 256, 16
    $region5: #{tpu_custom_call.1} parent=1 // pred_fallthru
      _
    // Predicated region
    $region6: #{tpu_custom_call.1} parent=1 // pred_check
      _
    $region7: #{tpu_custom_call.1} parent=1 // pred_check_branch
      %27 = sbr.rel (0) target = $region9
    $region8: #{tpu_custom_call.1} parent=1 // pred_region
      %s29 = ssub.s32 16384, 16384
      %30 = vsyncadd [#allocation6], %s29
      %s31 = sshll.u32 [#allocation5], 4
      %s32 = int_to_ptr.vmem [resolvable:$true] %s31
      %37 = dma.hbm_to_vmem [thread:$0]  %s1, 16384, %s32, [#allocation6], 128, 128, 8
    $region9: #{tpu_custom_call.1} parent=1 // pred_fallthru
      _
    // Predicated region
    $region10: #{tpu_custom_call.1} parent=1 // pred_check
      _
    $region11: #{tpu_custom_call.1} parent=1 // pred_check_branch
      %39 = sbr.rel (0) target = $region13
    $region12: #{tpu_custom_call.1} parent=1 // pred_region
      %s41 = ssub.s32 32, 32
      %42 = vsyncadd [#allocation6], %s41
      %s44 = sshll.u32 [#allocation7], 4
      %s45 = int_to_ptr.vmem [resolvable:$true] %s44
      %47 = dma.hbm_to_vmem [thread:$0]  %s2, 32, %s45, [#allocation6]
    $region13: #{tpu_custom_call.1} parent=1 // pred_fallthru
      _
    // Predicated region
    $region14: #{tpu_custom_call.1} parent=1 // pred_check
      _
    $region15: #{tpu_custom_call.1} parent=1 // pred_check_branch
      %49 = sbr.rel (0) target = $region17
    $region16: #{tpu_custom_call.1} parent=1 // pred_region
      %s51 = ssub.s32 2048, 2048
      %52 = vsyncadd [#allocation9], %s51
      %s53 = sshll.u32 [#allocation8], 4
      %s54 = int_to_ptr.vmem [resolvable:$true] %s53
      %59 = dma.hbm_to_vmem [thread:$0]  %s3, 2048, %s54, [#allocation9], 64, 64, 4
    $region17: #{tpu_custom_call.1} parent=1 // pred_fallthru
      _
    // Predicated region
    $region18: #{tpu_custom_call.1} parent=1 // pred_check
      _
    $region19: #{tpu_custom_call.1} parent=1 // pred_check_branch
      %61 = sbr.rel (0) target = $region21
    $region20: #{tpu_custom_call.1} parent=1 // pred_region
      %s63 = ssub.s32 16, 16
      %64 = vsyncadd [#allocation9], %s63
      %s66 = sshll.u32 [#allocation10], 4
      %s67 = int_to_ptr.vmem [resolvable:$true] %s66
      %69 = dma.hbm_to_vmem [thread:$0]  %s4, 16, %s67, [#allocation9]
    $region21: #{tpu_custom_call.1} parent=1 // pred_fallthru
      _
    // Predicated region
    $region22: #{tpu_custom_call.1} parent=1 // pred_check
      _
    $region23: #{tpu_custom_call.1} parent=1 // pred_check_branch
      %71 = sbr.rel (0) target = $region25
    $region24: #{tpu_custom_call.1} parent=1 // pred_region
      %72 = dma.done [#allocation3], 2048
    $region25: #{tpu_custom_call.1} parent=1 // pred_fallthru
      _
    // Predicated region
    $region26: #{tpu_custom_call.1} parent=1 // pred_check
      _
    $region27: #{tpu_custom_call.1} parent=1 // pred_check_branch
      %74 = sbr.rel (0) target = $region29
    $region28: #{tpu_custom_call.1} parent=1 // pred_region
      %75 = dma.done [#allocation6], 16384
    $region29: #{tpu_custom_call.1} parent=1 // pred_fallthru
      _
    // Predicated region
    $region30: #{tpu_custom_call.1} parent=1 // pred_check
      _
    $region31: #{tpu_custom_call.1} parent=1 // pred_check_branch
      %77 = sbr.rel (0) target = $region33
    $region32: #{tpu_custom_call.1} parent=1 // pred_region
      %78 = dma.done [#allocation6], 32
    $region33: #{tpu_custom_call.1} parent=1 // pred_fallthru
      _
    // Predicated region
    $region34: #{tpu_custom_call.1} parent=1 // pred_check
      _
    $region35: #{tpu_custom_call.1} parent=1 // pred_check_branch
      %80 = sbr.rel (0) target = $region37
    $region36: #{tpu_custom_call.1} parent=1 // pred_region
      %81 = dma.done [#allocation9], 2048
    $region37: #{tpu_custom_call.1} parent=1 // pred_fallthru
      _
    // Predicated region
    $region38: #{tpu_custom_call.1} parent=1 // pred_check
      _
    $region39: #{tpu_custom_call.1} parent=1 // pred_check_branch
      %83 = sbr.rel (0) target = $region41
    $region40: #{tpu_custom_call.1} parent=1 // pred_region
      %84 = dma.done [#allocation9], 16
    $region41: #{tpu_custom_call.1} parent=1 // pred_fallthru
      _
    %v86 = vld [vmem:[#allocation2] sm:$0xff]
    %v87 = vld [vmem:[#allocation2 + $0x8] sm:$0xff]
    %v88 = vld [vmem:[#allocation2 + $0x10] sm:$0xff]
    %v89 = vld [vmem:[#allocation2 + $0x18] sm:$0xff]
    %v90 = vld [vmem:[#allocation2 + $0x20] sm:$0xff]
    %v91 = vld [vmem:[#allocation2 + $0x28] sm:$0xff]
    %v92 = vld [vmem:[#allocation2 + $0x30] sm:$0xff]
    %v93 = vld [vmem:[#allocation2 + $0x38] sm:$0xff]
    %v94 = vld [vmem:[#allocation2 + $0x40] sm:$0xff]
    %v95 = vld [vmem:[#allocation2 + $0x48] sm:$0xff]
    %v96 = vld [vmem:[#allocation2 + $0x50] sm:$0xff]
    %v97 = vld [vmem:[#allocation2 + $0x58] sm:$0xff]
    %v98 = vld [vmem:[#allocation2 + $0x60] sm:$0xff]
    %v99 = vld [vmem:[#allocation2 + $0x68] sm:$0xff]
    %v100 = vld [vmem:[#allocation2 + $0x70] sm:$0xff]
    %v101 = vld [vmem:[#allocation2 + $0x78] sm:$0xff]
    %v118 = vcombine.low %v86, %v88
    %v119 = vcombine.high %v86, %v88
    %v120 = vcombine.low %v90, %v92
    %v121 = vcombine.high %v90, %v92
    %v123 = vunpack.c.l.s4 1983009808
    %v124 = vunpack.c.0.s8 %v123
    %v125 = vlaneseq
    %v126 = vshrl.u32 %v125, 7
    %v127 = vsub.s32 %v124, %v126
    %v128 = vrot.slane %v118, %v127
    %v130 = vunpack.c.l.s4 1983009808
    %v131 = vunpack.c.0.s8 %v130
    %v132 = vlaneseq
    %v133 = vshrl.u32 %v132, 7
    %v134 = vsub.s32 %v131, %v133
    %v135 = vrot.slane %v119, %v134
    %v137 = vunpack.c.l.s4 1983009808
    %v138 = vunpack.c.0.s8 %v137
    %v139 = vlaneseq
    %v140 = vshrl.u32 %v139, 7
    %v141 = vsub.s32 %v138, %v140
    %v142 = vrot.slane %v120, %v141
    %v144 = vunpack.c.l.s4 1983009808
    %v145 = vunpack.c.0.s8 %v144
    %v146 = vlaneseq
    %v147 = vshrl.u32 %v146, 7
    %v148 = vsub.s32 %v145, %v147
    %v149 = vrot.slane %v121, %v148
    %v150 = vcombine.low %v128, %v142
    %v151 = vcombine.high %v128, %v142
    %v152 = vcombine.low %v135, %v149
    %v153 = vcombine.high %v135, %v149
    %v154 = vcombine.low %v87, %v89
    %v155 = vcombine.high %v87, %v89
    %v156 = vcombine.low %v91, %v93
    %v157 = vcombine.high %v91, %v93
    %v159 = vunpack.c.l.s4 1983009808
    %v160 = vunpack.c.0.s8 %v159
    %v161 = vlaneseq
    %v162 = vshrl.u32 %v161, 7
    %v163 = vsub.s32 %v160, %v162
    %v164 = vrot.slane %v154, %v163
    %v166 = vunpack.c.l.s4 1983009808
    %v167 = vunpack.c.0.s8 %v166
    %v168 = vlaneseq
    %v169 = vshrl.u32 %v168, 7
    %v170 = vsub.s32 %v167, %v169
    %v171 = vrot.slane %v155, %v170
    %v173 = vunpack.c.l.s4 1983009808
    %v174 = vunpack.c.0.s8 %v173
    %v175 = vlaneseq
    %v176 = vshrl.u32 %v175, 7
    %v177 = vsub.s32 %v174, %v176
    %v178 = vrot.slane %v156, %v177
    %v180 = vunpack.c.l.s4 1983009808
    %v181 = vunpack.c.0.s8 %v180
    %v182 = vlaneseq
    %v183 = vshrl.u32 %v182, 7
    %v184 = vsub.s32 %v181, %v183
    %v185 = vrot.slane %v157, %v184
    %v186 = vcombine.low %v164, %v178
    %v187 = vcombine.high %v164, %v178
    %v188 = vcombine.low %v171, %v185
    %v189 = vcombine.high %v171, %v185
    %v190 = vcombine.low %v94, %v96
    %v191 = vcombine.high %v94, %v96
    %v192 = vcombine.low %v98, %v100
    %v193 = vcombine.high %v98, %v100
    %v195 = vunpack.c.l.s4 1983009808
    %v196 = vunpack.c.0.s8 %v195
    %v197 = vlaneseq
    %v198 = vshrl.u32 %v197, 7
    %v199 = vsub.s32 %v196, %v198
    %v200 = vrot.slane %v190, %v199
    %v202 = vunpack.c.l.s4 1983009808
    %v203 = vunpack.c.0.s8 %v202
    %v204 = vlaneseq
    %v205 = vshrl.u32 %v204, 7
    %v206 = vsub.s32 %v203, %v205
    %v207 = vrot.slane %v191, %v206
    %v209 = vunpack.c.l.s4 1983009808
    %v210 = vunpack.c.0.s8 %v209
    %v211 = vlaneseq
    %v212 = vshrl.u32 %v211, 7
    %v213 = vsub.s32 %v210, %v212
    %v214 = vrot.slane %v192, %v213
    %v216 = vunpack.c.l.s4 1983009808
    %v217 = vunpack.c.0.s8 %v216
    %v218 = vlaneseq
    %v219 = vshrl.u32 %v218, 7
    %v220 = vsub.s32 %v217, %v219
    %v221 = vrot.slane %v193, %v220
    %v222 = vcombine.low %v200, %v214
    %v223 = vcombine.high %v200, %v214
    %v224 = vcombine.low %v207, %v221
    %v225 = vcombine.high %v207, %v221
    %v226 = vcombine.low %v95, %v97
    %v227 = vcombine.high %v95, %v97
    %v228 = vcombine.low %v99, %v101
    %v229 = vcombine.high %v99, %v101
    %v231 = vunpack.c.l.s4 1983009808
    %v232 = vunpack.c.0.s8 %v231
    %v233 = vlaneseq
    %v234 = vshrl.u32 %v233, 7
    %v235 = vsub.s32 %v232, %v234
    %v236 = vrot.slane %v226, %v235
    %v238 = vunpack.c.l.s4 1983009808
    %v239 = vunpack.c.0.s8 %v238
    %v240 = vlaneseq
    %v241 = vshrl.u32 %v240, 7
    %v242 = vsub.s32 %v239, %v241
    %v243 = vrot.slane %v227, %v242
    %v245 = vunpack.c.l.s4 1983009808
    %v246 = vunpack.c.0.s8 %v245
    %v247 = vlaneseq
    %v248 = vshrl.u32 %v247, 7
    %v249 = vsub.s32 %v246, %v248
    %v250 = vrot.slane %v228, %v249
    %v252 = vunpack.c.l.s4 1983009808
    %v253 = vunpack.c.0.s8 %v252
    %v254 = vlaneseq
    %v255 = vshrl.u32 %v254, 7
    %v256 = vsub.s32 %v253, %v255
    %v257 = vrot.slane %v229, %v256
    %v258 = vcombine.low %v236, %v250
    %v259 = vcombine.high %v236, %v250
    %v260 = vcombine.low %v243, %v257
    %v261 = vcombine.high %v243, %v257
    %v278 = vpack.c.bf16 %v222, %v150
    %v279 = vpack.c.bf16 %v223, %v151
    %v280 = vpack.c.bf16 %v224, %v152
    %v281 = vpack.c.bf16 %v225, %v153
    %v282 = vpack.c.bf16 %v258, %v186
    %v283 = vpack.c.bf16 %v259, %v187
    %v284 = vpack.c.bf16 %v260, %v188
    %v285 = vpack.c.bf16 %v261, %v189
    %v286 = vld [vmem:[#allocation5] sm:$0xff]
    %v287 = vld [vmem:[#allocation5 + $0x8] sm:$0xff]
    %v288 = vld [vmem:[#allocation5 + $0x10] sm:$0xff]
    %v289 = vld [vmem:[#allocation5 + $0x18] sm:$0xff]
    %v290 = vld [vmem:[#allocation5 + $0x20] sm:$0xff]
    %v291 = vld [vmem:[#allocation5 + $0x28] sm:$0xff]
    %v292 = vld [vmem:[#allocation5 + $0x30] sm:$0xff]
    %v293 = vld [vmem:[#allocation5 + $0x38] sm:$0xff]
    %v294 = vld [vmem:[#allocation5 + $0x40] sm:$0xff]
    %v295 = vld [vmem:[#allocation5 + $0x48] sm:$0xff]
    %v296 = vld [vmem:[#allocation5 + $0x50] sm:$0xff]
    %v297 = vld [vmem:[#allocation5 + $0x58] sm:$0xff]
    %v298 = vld [vmem:[#allocation5 + $0x60] sm:$0xff]
    %v299 = vld [vmem:[#allocation5 + $0x68] sm:$0xff]
    %v300 = vld [vmem:[#allocation5 + $0x70] sm:$0xff]
    %v301 = vld [vmem:[#allocation5 + $0x78] sm:$0xff]
    %v302 = vld [vmem:[#allocation5 + $0x80] sm:$0xff]
    %v303 = vld [vmem:[#allocation5 + $0x88] sm:$0xff]
    %v304 = vld [vmem:[#allocation5 + $0x90] sm:$0xff]
    %v305 = vld [vmem:[#allocation5 + $0x98] sm:$0xff]
    %v306 = vld [vmem:[#allocation5 + $0xa0] sm:$0xff]
    %v307 = vld [vmem:[#allocation5 + $0xa8] sm:$0xff]
    %v308 = vld [vmem:[#allocation5 + $0xb0] sm:$0xff]
    %v309 = vld [vmem:[#allocation5 + $0xb8] sm:$0xff]
    %v310 = vld [vmem:[#allocation5 + $0xc0] sm:$0xff]
    %v311 = vld [vmem:[#allocation5 + $0xc8] sm:$0xff]
    %v312 = vld [vmem:[#allocation5 + $0xd0] sm:$0xff]
    %v313 = vld [vmem:[#allocation5 + $0xd8] sm:$0xff]
    %v314 = vld [vmem:[#allocation5 + $0xe0] sm:$0xff]
    %v315 = vld [vmem:[#allocation5 + $0xe8] sm:$0xff]
    %v316 = vld [vmem:[#allocation5 + $0xf0] sm:$0xff]
    %v317 = vld [vmem:[#allocation5 + $0xf8] sm:$0xff]
    %v318 = vld [vmem:[#allocation5 + $0x100] sm:$0xff]
    %v319 = vld [vmem:[#allocation5 + $0x108] sm:$0xff]
    %v320 = vld [vmem:[#allocation5 + $0x110] sm:$0xff]
    %v321 = vld [vmem:[#allocation5 + $0x118] sm:$0xff]
    %v322 = vld [vmem:[#allocation5 + $0x120] sm:$0xff]
    %v323 = vld [vmem:[#allocation5 + $0x128] sm:$0xff]
    %v324 = vld [vmem:[#allocation5 + $0x130] sm:$0xff]
    %v325 = vld [vmem:[#allocation5 + $0x138] sm:$0xff]
    %v326 = vld [vmem:[#allocation5 + $0x140] sm:$0xff]
    %v327 = vld [vmem:[#allocation5 + $0x148] sm:$0xff]
    %v328 = vld [vmem:[#allocation5 + $0x150] sm:$0xff]
    %v329 = vld [vmem:[#allocation5 + $0x158] sm:$0xff]
    %v330 = vld [vmem:[#allocation5 + $0x160] sm:$0xff]
    %v331 = vld [vmem:[#allocation5 + $0x168] sm:$0xff]
    %v332 = vld [vmem:[#allocation5 + $0x170] sm:$0xff]
    %v333 = vld [vmem:[#allocation5 + $0x178] sm:$0xff]
    %v334 = vld [vmem:[#allocation5 + $0x180] sm:$0xff]
    %v335 = vld [vmem:[#allocation5 + $0x188] sm:$0xff]
    %v336 = vld [vmem:[#allocation5 + $0x190] sm:$0xff]
    %v337 = vld [vmem:[#allocation5 + $0x198] sm:$0xff]
    %v338 = vld [vmem:[#allocation5 + $0x1a0] sm:$0xff]
    %v339 = vld [vmem:[#allocation5 + $0x1a8] sm:$0xff]
    %v340 = vld [vmem:[#allocation5 + $0x1b0] sm:$0xff]
    %v341 = vld [vmem:[#allocation5 + $0x1b8] sm:$0xff]
    %v342 = vld [vmem:[#allocation5 + $0x1c0] sm:$0xff]
    %v343 = vld [vmem:[#allocation5 + $0x1c8] sm:$0xff]
    %v344 = vld [vmem:[#allocation5 + $0x1d0] sm:$0xff]
    %v345 = vld [vmem:[#allocation5 + $0x1d8] sm:$0xff]
    %v346 = vld [vmem:[#allocation5 + $0x1e0] sm:$0xff]
    %v347 = vld [vmem:[#allocation5 + $0x1e8] sm:$0xff]
    %v348 = vld [vmem:[#allocation5 + $0x1f0] sm:$0xff]
    %v349 = vld [vmem:[#allocation5 + $0x1f8] sm:$0xff]
    %v350 = vld [vmem:[#allocation5 + $0x200] sm:$0xff]
    %v351 = vld [vmem:[#allocation5 + $0x208] sm:$0xff]
    %v352 = vld [vmem:[#allocation5 + $0x210] sm:$0xff]
    %v353 = vld [vmem:[#allocation5 + $0x218] sm:$0xff]
    %v354 = vld [vmem:[#allocation5 + $0x220] sm:$0xff]
    %v355 = vld [vmem:[#allocation5 + $0x228] sm:$0xff]
    %v356 = vld [vmem:[#allocation5 + $0x230] sm:$0xff]
    %v357 = vld [vmem:[#allocation5 + $0x238] sm:$0xff]
    %v358 = vld [vmem:[#allocation5 + $0x240] sm:$0xff]
    %v359 = vld [vmem:[#allocation5 + $0x248] sm:$0xff]
    %v360 = vld [vmem:[#allocation5 + $0x250] sm:$0xff]
    %v361 = vld [vmem:[#allocation5 + $0x258] sm:$0xff]
    %v362 = vld [vmem:[#allocation5 + $0x260] sm:$0xff]
    %v363 = vld [vmem:[#allocation5 + $0x268] sm:$0xff]
    %v364 = vld [vmem:[#allocation5 + $0x270] sm:$0xff]
    %v365 = vld [vmem:[#allocation5 + $0x278] sm:$0xff]
    %v366 = vld [vmem:[#allocation5 + $0x280] sm:$0xff]
    %v367 = vld [vmem:[#allocation5 + $0x288] sm:$0xff]
    %v368 = vld [vmem:[#allocation5 + $0x290] sm:$0xff]
    %v369 = vld [vmem:[#allocation5 + $0x298] sm:$0xff]
    %v370 = vld [vmem:[#allocation5 + $0x2a0] sm:$0xff]
    %v371 = vld [vmem:[#allocation5 + $0x2a8] sm:$0xff]
    %v372 = vld [vmem:[#allocation5 + $0x2b0] sm:$0xff]
    %v373 = vld [vmem:[#allocation5 + $0x2b8] sm:$0xff]
    %v374 = vld [vmem:[#allocation5 + $0x2c0] sm:$0xff]
    %v375 = vld [vmem:[#allocation5 + $0x2c8] sm:$0xff]
    %v376 = vld [vmem:[#allocation5 + $0x2d0] sm:$0xff]
    %v377 = vld [vmem:[#allocation5 + $0x2d8] sm:$0xff]
    %v378 = vld [vmem:[#allocation5 + $0x2e0] sm:$0xff]
    %v379 = vld [vmem:[#allocation5 + $0x2e8] sm:$0xff]
    %v380 = vld [vmem:[#allocation5 + $0x2f0] sm:$0xff]
    %v381 = vld [vmem:[#allocation5 + $0x2f8] sm:$0xff]
    %v382 = vld [vmem:[#allocation5 + $0x300] sm:$0xff]
    %v383 = vld [vmem:[#allocation5 + $0x308] sm:$0xff]
    %v384 = vld [vmem:[#allocation5 + $0x310] sm:$0xff]
    %v385 = vld [vmem:[#allocation5 + $0x318] sm:$0xff]
    %v386 = vld [vmem:[#allocation5 + $0x320] sm:$0xff]
    %v387 = vld [vmem:[#allocation5 + $0x328] sm:$0xff]
    %v388 = vld [vmem:[#allocation5 + $0x330] sm:$0xff]
    %v389 = vld [vmem:[#allocation5 + $0x338] sm:$0xff]
    %v390 = vld [vmem:[#allocation5 + $0x340] sm:$0xff]
    %v391 = vld [vmem:[#allocation5 + $0x348] sm:$0xff]
    %v392 = vld [vmem:[#allocation5 + $0x350] sm:$0xff]
    %v393 = vld [vmem:[#allocation5 + $0x358] sm:$0xff]
    %v394 = vld [vmem:[#allocation5 + $0x360] sm:$0xff]
    %v395 = vld [vmem:[#allocation5 + $0x368] sm:$0xff]
    %v396 = vld [vmem:[#allocation5 + $0x370] sm:$0xff]
    %v397 = vld [vmem:[#allocation5 + $0x378] sm:$0xff]
    %v398 = vld [vmem:[#allocation5 + $0x380] sm:$0xff]
    %v399 = vld [vmem:[#allocation5 + $0x388] sm:$0xff]
    %v400 = vld [vmem:[#allocation5 + $0x390] sm:$0xff]
    %v401 = vld [vmem:[#allocation5 + $0x398] sm:$0xff]
    %v402 = vld [vmem:[#allocation5 + $0x3a0] sm:$0xff]
    %v403 = vld [vmem:[#allocation5 + $0x3a8] sm:$0xff]
    %v404 = vld [vmem:[#allocation5 + $0x3b0] sm:$0xff]
    %v405 = vld [vmem:[#allocation5 + $0x3b8] sm:$0xff]
    %v406 = vld [vmem:[#allocation5 + $0x3c0] sm:$0xff]
    %v407 = vld [vmem:[#allocation5 + $0x3c8] sm:$0xff]
    %v408 = vld [vmem:[#allocation5 + $0x3d0] sm:$0xff]
    %v409 = vld [vmem:[#allocation5 + $0x3d8] sm:$0xff]
    %v410 = vld [vmem:[#allocation5 + $0x3e0] sm:$0xff]
    %v411 = vld [vmem:[#allocation5 + $0x3e8] sm:$0xff]
    %v412 = vld [vmem:[#allocation5 + $0x3f0] sm:$0xff]
    %v413 = vld [vmem:[#allocation5 + $0x3f8] sm:$0xff]
    %v414 = vld [vmem:[#allocation7] sm:$0x3]
    %v416 = vlaneseq
    %v417 = vshrl.u32 %v416, 7
    %v418 = vsub.s32 0, %v417
    %v419 = vrot.slane %v414, %v418
    %v420 = vlaneseq
    %v421 = vshrl.u32 %v420, 7
    %v422 = vsub.s32 1, %v421
    %v423 = vrot.slane %v414, %v422
    %v554 = vunpack.c.l.b16 %v286
    %v555 = vunpack.c.h.b16 %v286
    %v556 = vunpack.c.l.b16 %v287
    %v557 = vunpack.c.h.b16 %v287
    %v558 = vunpack.c.l.b16 %v288
    %v559 = vunpack.c.h.b16 %v288
    %v560 = vunpack.c.l.b16 %v289
    %v561 = vunpack.c.h.b16 %v289
    %v562 = vunpack.c.l.b16 %v290
    %v563 = vunpack.c.h.b16 %v290
    %v564 = vunpack.c.l.b16 %v291
    %v565 = vunpack.c.h.b16 %v291
    %v566 = vunpack.c.l.b16 %v292
    %v567 = vunpack.c.h.b16 %v292
    %v568 = vunpack.c.l.b16 %v293
    %v569 = vunpack.c.h.b16 %v293
    %v570 = vunpack.c.l.b16 %v294
    %v571 = vunpack.c.h.b16 %v294
    %v572 = vunpack.c.l.b16 %v295
    %v573 = vunpack.c.h.b16 %v295
    %v574 = vunpack.c.l.b16 %v296
    %v575 = vunpack.c.h.b16 %v296
    %v576 = vunpack.c.l.b16 %v297
    %v577 = vunpack.c.h.b16 %v297
    %v578 = vunpack.c.l.b16 %v298
    %v579 = vunpack.c.h.b16 %v298
    %v580 = vunpack.c.l.b16 %v299
    %v581 = vunpack.c.h.b16 %v299
    %v582 = vunpack.c.l.b16 %v300
    %v583 = vunpack.c.h.b16 %v300
    %v584 = vunpack.c.l.b16 %v301
    %v585 = vunpack.c.h.b16 %v301
    %v586 = vunpack.c.l.b16 %v302
    %v587 = vunpack.c.h.b16 %v302
    %v588 = vunpack.c.l.b16 %v303
    %v589 = vunpack.c.h.b16 %v303
    %v590 = vunpack.c.l.b16 %v304
    %v591 = vunpack.c.h.b16 %v304
    %v592 = vunpack.c.l.b16 %v305
    %v593 = vunpack.c.h.b16 %v305
    %v594 = vunpack.c.l.b16 %v306
    %v595 = vunpack.c.h.b16 %v306
    %v596 = vunpack.c.l.b16 %v307
    %v597 = vunpack.c.h.b16 %v307
    %v598 = vunpack.c.l.b16 %v308
    %v599 = vunpack.c.h.b16 %v308
    %v600 = vunpack.c.l.b16 %v309
    %v601 = vunpack.c.h.b16 %v309
    %v602 = vunpack.c.l.b16 %v310
    %v603 = vunpack.c.h.b16 %v310
    %v604 = vunpack.c.l.b16 %v311
    %v605 = vunpack.c.h.b16 %v311
    %v606 = vunpack.c.l.b16 %v312
    %v607 = vunpack.c.h.b16 %v312
    %v608 = vunpack.c.l.b16 %v313
    %v609 = vunpack.c.h.b16 %v313
    %v610 = vunpack.c.l.b16 %v314
    %v611 = vunpack.c.h.b16 %v314
    %v612 = vunpack.c.l.b16 %v315
    %v613 = vunpack.c.h.b16 %v315
    %v614 = vunpack.c.l.b16 %v316
    %v615 = vunpack.c.h.b16 %v316
    %v616 = vunpack.c.l.b16 %v317
    %v617 = vunpack.c.h.b16 %v317
    %v618 = vunpack.c.l.b16 %v318
    %v619 = vunpack.c.h.b16 %v318
    %v620 = vunpack.c.l.b16 %v319
    %v621 = vunpack.c.h.b16 %v319
    %v622 = vunpack.c.l.b16 %v320
    %v623 = vunpack.c.h.b16 %v320
    %v624 = vunpack.c.l.b16 %v321
    %v625 = vunpack.c.h.b16 %v321
    %v626 = vunpack.c.l.b16 %v322
    %v627 = vunpack.c.h.b16 %v322
    %v628 = vunpack.c.l.b16 %v323
    %v629 = vunpack.c.h.b16 %v323
    %v630 = vunpack.c.l.b16 %v324
    %v631 = vunpack.c.h.b16 %v324
    %v632 = vunpack.c.l.b16 %v325
    %v633 = vunpack.c.h.b16 %v325
    %v634 = vunpack.c.l.b16 %v326
    %v635 = vunpack.c.h.b16 %v326
    %v636 = vunpack.c.l.b16 %v327
    %v637 = vunpack.c.h.b16 %v327
    %v638 = vunpack.c.l.b16 %v328
    %v639 = vunpack.c.h.b16 %v328
    %v640 = vunpack.c.l.b16 %v329
    %v641 = vunpack.c.h.b16 %v329
    %v642 = vunpack.c.l.b16 %v330
    %v643 = vunpack.c.h.b16 %v330
    %v644 = vunpack.c.l.b16 %v331
    %v645 = vunpack.c.h.b16 %v331
    %v646 = vunpack.c.l.b16 %v332
    %v647 = vunpack.c.h.b16 %v332
    %v648 = vunpack.c.l.b16 %v333
    %v649 = vunpack.c.h.b16 %v333
    %v650 = vunpack.c.l.b16 %v334
    %v651 = vunpack.c.h.b16 %v334
    %v652 = vunpack.c.l.b16 %v335
    %v653 = vunpack.c.h.b16 %v335
    %v654 = vunpack.c.l.b16 %v336
    %v655 = vunpack.c.h.b16 %v336
    %v656 = vunpack.c.l.b16 %v337
    %v657 = vunpack.c.h.b16 %v337
    %v658 = vunpack.c.l.b16 %v338
    %v659 = vunpack.c.h.b16 %v338
    %v660 = vunpack.c.l.b16 %v339
    %v661 = vunpack.c.h.b16 %v339
    %v662 = vunpack.c.l.b16 %v340
    %v663 = vunpack.c.h.b16 %v340
    %v664 = vunpack.c.l.b16 %v341
    %v665 = vunpack.c.h.b16 %v341
    %v666 = vunpack.c.l.b16 %v342
    %v667 = vunpack.c.h.b16 %v342
    %v668 = vunpack.c.l.b16 %v343
    %v669 = vunpack.c.h.b16 %v343
    %v670 = vunpack.c.l.b16 %v344
    %v671 = vunpack.c.h.b16 %v344
    %v672 = vunpack.c.l.b16 %v345
    %v673 = vunpack.c.h.b16 %v345
    %v674 = vunpack.c.l.b16 %v346
    %v675 = vunpack.c.h.b16 %v346
    %v676 = vunpack.c.l.b16 %v347
    %v677 = vunpack.c.h.b16 %v347
    %v678 = vunpack.c.l.b16 %v348
    %v679 = vunpack.c.h.b16 %v348
    %v680 = vunpack.c.l.b16 %v349
    %v681 = vunpack.c.h.b16 %v349
    %v682 = vunpack.c.l.b16 %v350
    %v683 = vunpack.c.h.b16 %v350
    %v684 = vunpack.c.l.b16 %v351
    %v685 = vunpack.c.h.b16 %v351
    %v686 = vunpack.c.l.b16 %v352
    %v687 = vunpack.c.h.b16 %v352
    %v688 = vunpack.c.l.b16 %v353
    %v689 = vunpack.c.h.b16 %v353
    %v690 = vunpack.c.l.b16 %v354
    %v691 = vunpack.c.h.b16 %v354
    %v692 = vunpack.c.l.b16 %v355
    %v693 = vunpack.c.h.b16 %v355
    %v694 = vunpack.c.l.b16 %v356
    %v695 = vunpack.c.h.b16 %v356
    %v696 = vunpack.c.l.b16 %v357
    %v697 = vunpack.c.h.b16 %v357
    %v698 = vunpack.c.l.b16 %v358
    %v699 = vunpack.c.h.b16 %v358
    %v700 = vunpack.c.l.b16 %v359
    %v701 = vunpack.c.h.b16 %v359
    %v702 = vunpack.c.l.b16 %v360
    %v703 = vunpack.c.h.b16 %v360
    %v704 = vunpack.c.l.b16 %v361
    %v705 = vunpack.c.h.b16 %v361
    %v706 = vunpack.c.l.b16 %v362
    %v707 = vunpack.c.h.b16 %v362
    %v708 = vunpack.c.l.b16 %v363
    %v709 = vunpack.c.h.b16 %v363
    %v710 = vunpack.c.l.b16 %v364
    %v711 = vunpack.c.h.b16 %v364
    %v712 = vunpack.c.l.b16 %v365
    %v713 = vunpack.c.h.b16 %v365
    %v714 = vunpack.c.l.b16 %v366
    %v715 = vunpack.c.h.b16 %v366
    %v716 = vunpack.c.l.b16 %v367
    %v717 = vunpack.c.h.b16 %v367
    %v718 = vunpack.c.l.b16 %v368
    %v719 = vunpack.c.h.b16 %v368
    %v720 = vunpack.c.l.b16 %v369
    %v721 = vunpack.c.h.b16 %v369
    %v722 = vunpack.c.l.b16 %v370
    %v723 = vunpack.c.h.b16 %v370
    %v724 = vunpack.c.l.b16 %v371
    %v725 = vunpack.c.h.b16 %v371
    %v726 = vunpack.c.l.b16 %v372
    %v727 = vunpack.c.h.b16 %v372
    %v728 = vunpack.c.l.b16 %v373
    %v729 = vunpack.c.h.b16 %v373
    %v730 = vunpack.c.l.b16 %v374
    %v731 = vunpack.c.h.b16 %v374
    %v732 = vunpack.c.l.b16 %v375
    %v733 = vunpack.c.h.b16 %v375
    %v734 = vunpack.c.l.b16 %v376
    %v735 = vunpack.c.h.b16 %v376
    %v736 = vunpack.c.l.b16 %v377
    %v737 = vunpack.c.h.b16 %v377
    %v738 = vunpack.c.l.b16 %v378
    %v739 = vunpack.c.h.b16 %v378
    %v740 = vunpack.c.l.b16 %v379
    %v741 = vunpack.c.h.b16 %v379
    %v742 = vunpack.c.l.b16 %v380
    %v743 = vunpack.c.h.b16 %v380
    %v744 = vunpack.c.l.b16 %v381
    %v745 = vunpack.c.h.b16 %v381
    %v746 = vunpack.c.l.b16 %v382
    %v747 = vunpack.c.h.b16 %v382
    %v748 = vunpack.c.l.b16 %v383
    %v749 = vunpack.c.h.b16 %v383
    %v750 = vunpack.c.l.b16 %v384
    %v751 = vunpack.c.h.b16 %v384
    %v752 = vunpack.c.l.b16 %v385
    %v753 = vunpack.c.h.b16 %v385
    %v754 = vunpack.c.l.b16 %v386
    %v755 = vunpack.c.h.b16 %v386
    %v756 = vunpack.c.l.b16 %v387
    %v757 = vunpack.c.h.b16 %v387
    %v758 = vunpack.c.l.b16 %v388
    %v759 = vunpack.c.h.b16 %v388
    %v760 = vunpack.c.l.b16 %v389
    %v761 = vunpack.c.h.b16 %v389
    %v762 = vunpack.c.l.b16 %v390
    %v763 = vunpack.c.h.b16 %v390
    %v764 = vunpack.c.l.b16 %v391
    %v765 = vunpack.c.h.b16 %v391
    %v766 = vunpack.c.l.b16 %v392
    %v767 = vunpack.c.h.b16 %v392
    %v768 = vunpack.c.l.b16 %v393
    %v769 = vunpack.c.h.b16 %v393
    %v770 = vunpack.c.l.b16 %v394
    %v771 = vunpack.c.h.b16 %v394
    %v772 = vunpack.c.l.b16 %v395
    %v773 = vunpack.c.h.b16 %v395
    %v774 = vunpack.c.l.b16 %v396
    %v775 = vunpack.c.h.b16 %v396
    %v776 = vunpack.c.l.b16 %v397
    %v777 = vunpack.c.h.b16 %v397
    %v778 = vunpack.c.l.b16 %v398
    %v779 = vunpack.c.h.b16 %v398
    %v780 = vunpack.c.l.b16 %v399
    %v781 = vunpack.c.h.b16 %v399
    %v782 = vunpack.c.l.b16 %v400
    %v783 = vunpack.c.h.b16 %v400
    %v784 = vunpack.c.l.b16 %v401
    %v785 = vunpack.c.h.b16 %v401
    %v786 = vunpack.c.l.b16 %v402
    %v787 = vunpack.c.h.b16 %v402
    %v788 = vunpack.c.l.b16 %v403
    %v789 = vunpack.c.h.b16 %v403
    %v790 = vunpack.c.l.b16 %v404
    %v791 = vunpack.c.h.b16 %v404
    %v792 = vunpack.c.l.b16 %v405
    %v793 = vunpack.c.h.b16 %v405
    %v794 = vunpack.c.l.b16 %v406
    %v795 = vunpack.c.h.b16 %v406
    %v796 = vunpack.c.l.b16 %v407
    %v797 = vunpack.c.h.b16 %v407
    %v798 = vunpack.c.l.b16 %v408
    %v799 = vunpack.c.h.b16 %v408
    %v800 = vunpack.c.l.b16 %v409
    %v801 = vunpack.c.h.b16 %v409
    %v802 = vunpack.c.l.b16 %v410
    %v803 = vunpack.c.h.b16 %v410
    %v804 = vunpack.c.l.b16 %v411
    %v805 = vunpack.c.h.b16 %v411
    %v806 = vunpack.c.l.b16 %v412
    %v807 = vunpack.c.h.b16 %v412
    %v808 = vunpack.c.l.b16 %v413
    %v809 = vunpack.c.h.b16 %v413
    %v810 = vpack.c.b16 %v556, %v554
    %v811 = vpack.c.b16 %v557, %v555
    %v812 = vpack.c.b16 %v560, %v558
    %v813 = vpack.c.b16 %v561, %v559
    %v814 = vpack.c.b16 %v564, %v562
    %v815 = vpack.c.b16 %v565, %v563
    %v816 = vpack.c.b16 %v568, %v566
    %v817 = vpack.c.b16 %v569, %v567
    %v818 = vpack.c.b16 %v572, %v570
    %v819 = vpack.c.b16 %v573, %v571
    %v820 = vpack.c.b16 %v576, %v574
    %v821 = vpack.c.b16 %v577, %v575
    %v822 = vpack.c.b16 %v580, %v578
    %v823 = vpack.c.b16 %v581, %v579
    %v824 = vpack.c.b16 %v584, %v582
    %v825 = vpack.c.b16 %v585, %v583
    %v826 = vpack.c.b16 %v588, %v586
    %v827 = vpack.c.b16 %v589, %v587
    %v828 = vpack.c.b16 %v592, %v590
    %v829 = vpack.c.b16 %v593, %v591
    %v830 = vpack.c.b16 %v596, %v594
    %v831 = vpack.c.b16 %v597, %v595
    %v832 = vpack.c.b16 %v600, %v598
    %v833 = vpack.c.b16 %v601, %v599
    %v834 = vpack.c.b16 %v604, %v602
    %v835 = vpack.c.b16 %v605, %v603
    %v836 = vpack.c.b16 %v608, %v606
    %v837 = vpack.c.b16 %v609, %v607
    %v838 = vpack.c.b16 %v612, %v610
    %v839 = vpack.c.b16 %v613, %v611
    %v840 = vpack.c.b16 %v616, %v614
    %v841 = vpack.c.b16 %v617, %v615
    %v842 = vpack.c.b16 %v620, %v618
    %v843 = vpack.c.b16 %v621, %v619
    %v844 = vpack.c.b16 %v624, %v622
    %v845 = vpack.c.b16 %v625, %v623
    %v846 = vpack.c.b16 %v628, %v626
    %v847 = vpack.c.b16 %v629, %v627
    %v848 = vpack.c.b16 %v632, %v630
    %v849 = vpack.c.b16 %v633, %v631
    %v850 = vpack.c.b16 %v636, %v634
    %v851 = vpack.c.b16 %v637, %v635
    %v852 = vpack.c.b16 %v640, %v638
    %v853 = vpack.c.b16 %v641, %v639
    %v854 = vpack.c.b16 %v644, %v642
    %v855 = vpack.c.b16 %v645, %v643
    %v856 = vpack.c.b16 %v648, %v646
    %v857 = vpack.c.b16 %v649, %v647
    %v858 = vpack.c.b16 %v652, %v650
    %v859 = vpack.c.b16 %v653, %v651
    %v860 = vpack.c.b16 %v656, %v654
    %v861 = vpack.c.b16 %v657, %v655
    %v862 = vpack.c.b16 %v660, %v658
    %v863 = vpack.c.b16 %v661, %v659
    %v864 = vpack.c.b16 %v664, %v662
    %v865 = vpack.c.b16 %v665, %v663
    %v866 = vpack.c.b16 %v668, %v666
    %v867 = vpack.c.b16 %v669, %v667
    %v868 = vpack.c.b16 %v672, %v670
    %v869 = vpack.c.b16 %v673, %v671
    %v870 = vpack.c.b16 %v676, %v674
    %v871 = vpack.c.b16 %v677, %v675
    %v872 = vpack.c.b16 %v680, %v678
    %v873 = vpack.c.b16 %v681, %v679
    %v874 = vpack.c.b16 %v684, %v682
    %v875 = vpack.c.b16 %v685, %v683
    %v876 = vpack.c.b16 %v688, %v686
    %v877 = vpack.c.b16 %v689, %v687
    %v878 = vpack.c.b16 %v692, %v690
    %v879 = vpack.c.b16 %v693, %v691
    %v880 = vpack.c.b16 %v696, %v694
    %v881 = vpack.c.b16 %v697, %v695
    %v882 = vpack.c.b16 %v700, %v698
    %v883 = vpack.c.b16 %v701, %v699
    %v884 = vpack.c.b16 %v704, %v702
    %v885 = vpack.c.b16 %v705, %v703
    %v886 = vpack.c.b16 %v708, %v706
    %v887 = vpack.c.b16 %v709, %v707
    %v888 = vpack.c.b16 %v712, %v710
    %v889 = vpack.c.b16 %v713, %v711
    %v890 = vpack.c.b16 %v716, %v714
    %v891 = vpack.c.b16 %v717, %v715
    %v892 = vpack.c.b16 %v720, %v718
    %v893 = vpack.c.b16 %v721, %v719
    %v894 = vpack.c.b16 %v724, %v722
    %v895 = vpack.c.b16 %v725, %v723
    %v896 = vpack.c.b16 %v728, %v726
    %v897 = vpack.c.b16 %v729, %v727
    %v898 = vpack.c.b16 %v732, %v730
    %v899 = vpack.c.b16 %v733, %v731
    %v900 = vpack.c.b16 %v736, %v734
    %v901 = vpack.c.b16 %v737, %v735
    %v902 = vpack.c.b16 %v740, %v738
    %v903 = vpack.c.b16 %v741, %v739
    %v904 = vpack.c.b16 %v744, %v742
    %v905 = vpack.c.b16 %v745, %v743
    %v906 = vpack.c.b16 %v748, %v746
    %v907 = vpack.c.b16 %v749, %v747
    %v908 = vpack.c.b16 %v752, %v750
    %v909 = vpack.c.b16 %v753, %v751
    %v910 = vpack.c.b16 %v756, %v754
    %v911 = vpack.c.b16 %v757, %v755
    %v912 = vpack.c.b16 %v760, %v758
    %v913 = vpack.c.b16 %v761, %v759
    %v914 = vpack.c.b16 %v764, %v762
    %v915 = vpack.c.b16 %v765, %v763
    %v916 = vpack.c.b16 %v768, %v766
    %v917 = vpack.c.b16 %v769, %v767
    %v918 = vpack.c.b16 %v772, %v770
    %v919 = vpack.c.b16 %v773, %v771
    %v920 = vpack.c.b16 %v776, %v774
    %v921 = vpack.c.b16 %v777, %v775
    %v922 = vpack.c.b16 %v780, %v778
    %v923 = vpack.c.b16 %v781, %v779
    %v924 = vpack.c.b16 %v784, %v782
    %v925 = vpack.c.b16 %v785, %v783
    %v926 = vpack.c.b16 %v788, %v786
    %v927 = vpack.c.b16 %v789, %v787
    %v928 = vpack.c.b16 %v792, %v790
    %v929 = vpack.c.b16 %v793, %v791
    %v930 = vpack.c.b16 %v796, %v794
    %v931 = vpack.c.b16 %v797, %v795
    %v932 = vpack.c.b16 %v800, %v798
    %v933 = vpack.c.b16 %v801, %v799
    %v934 = vpack.c.b16 %v804, %v802
    %v935 = vpack.c.b16 %v805, %v803
    %v936 = vpack.c.b16 %v808, %v806
    %v937 = vpack.c.b16 %v809, %v807
    %1066 = vmatprep.subr.bf16.mxu0 %v811
    %1067 = vmatpush1.bf16.msra.mxu0 %v810
    %1068 = vmatprep.subr.bf16.mxu0 %v813
    %1069 = vmatpush1.bf16.msra.mxu0 %v812
    %1070 = vmatprep.subr.bf16.mxu0 %v815
    %1071 = vmatpush1.bf16.msra.mxu0 %v814
    %1072 = vmatprep.subr.bf16.mxu0 %v817
    %1073 = vmatpush1.bf16.msra.mxu0 %v816
    %1074 = vmatprep.subr.bf16.mxu0 %v819
    %1075 = vmatpush1.bf16.msra.mxu0 %v818
    %1076 = vmatprep.subr.bf16.mxu0 %v821
    %1077 = vmatpush1.bf16.msra.mxu0 %v820
    %1078 = vmatprep.subr.bf16.mxu0 %v823
    %1079 = vmatpush1.bf16.msra.mxu0 %v822
    %1080 = vmatprep.subr.bf16.mxu0 %v825
    %1081 = vmatpush1.bf16.msra.mxu0 %v824
    %1082 = vmatprep.subr.bf16.mxu0 %v827
    %1083 = vmatpush1.bf16.msra.mxu0 %v826
    %1084 = vmatprep.subr.bf16.mxu0 %v829
    %1085 = vmatpush1.bf16.msra.mxu0 %v828
    %1086 = vmatprep.subr.bf16.mxu0 %v831
    %1087 = vmatpush1.bf16.msra.mxu0 %v830
    %1088 = vmatprep.subr.bf16.mxu0 %v833
    %1089 = vmatpush1.bf16.msra.mxu0 %v832
    %1090 = vmatprep.subr.bf16.mxu0 %v835
    %1091 = vmatpush1.bf16.msra.mxu0 %v834
    %1092 = vmatprep.subr.bf16.mxu0 %v837
    %1093 = vmatpush1.bf16.msra.mxu0 %v836
    %1094 = vmatprep.subr.bf16.mxu0 %v839
    %1095 = vmatpush1.bf16.msra.mxu0 %v838
    %1096 = vmatprep.subr.bf16.mxu0 %v841
    %1097 = vmatpush1.bf16.msra.mxu0 %v840
    %1098 = vmatprep.mubr.bf16.mxu0 %v279
    %1099 = vmatmul.mubr.bf16.gmra.mrb[0].mxu0 %v278
    %v1100 = vpop.f32.mrb[0].mxu0
    %v1101 = vadd.f32 %v419, %v1100
    %v1102 = vpop.f32.mrb[0].mxu0
    %v1103 = vadd.f32 %v423, %v1102
    %v1104 = vpop.f32.mrb[0].mxu0
    %v1105 = vadd.f32 %v419, %v1104
    %v1106 = vpop.f32.mrb[0].mxu0
    %v1107 = vadd.f32 %v423, %v1106
    %1108 = vdwg.mxu0
    %1109 = vmatprep.subr.bf16.mxu0 %v843
    %1110 = vmatpush1.bf16.msra.mxu0 %v842
    %1111 = vmatprep.subr.bf16.mxu0 %v845
    %1112 = vmatpush1.bf16.msra.mxu0 %v844
    %1113 = vmatprep.subr.bf16.mxu0 %v847
    %1114 = vmatpush1.bf16.msra.mxu0 %v846
    %1115 = vmatprep.subr.bf16.mxu0 %v849
    %1116 = vmatpush1.bf16.msra.mxu0 %v848
    %1117 = vmatprep.subr.bf16.mxu0 %v851
    %1118 = vmatpush1.bf16.msra.mxu0 %v850
    %1119 = vmatprep.subr.bf16.mxu0 %v853
    %1120 = vmatpush1.bf16.msra.mxu0 %v852
    %1121 = vmatprep.subr.bf16.mxu0 %v855
    %1122 = vmatpush1.bf16.msra.mxu0 %v854
    %1123 = vmatprep.subr.bf16.mxu0 %v857
    %1124 = vmatpush1.bf16.msra.mxu0 %v856
    %1125 = vmatprep.subr.bf16.mxu0 %v859
    %1126 = vmatpush1.bf16.msra.mxu0 %v858
    %1127 = vmatprep.subr.bf16.mxu0 %v861
    %1128 = vmatpush1.bf16.msra.mxu0 %v860
    %1129 = vmatprep.subr.bf16.mxu0 %v863
    %1130 = vmatpush1.bf16.msra.mxu0 %v862
    %1131 = vmatprep.subr.bf16.mxu0 %v865
    %1132 = vmatpush1.bf16.msra.mxu0 %v864
    %1133 = vmatprep.subr.bf16.mxu0 %v867
    %1134 = vmatpush1.bf16.msra.mxu0 %v866
    %1135 = vmatprep.subr.bf16.mxu0 %v869
    %1136 = vmatpush1.bf16.msra.mxu0 %v868
    %1137 = vmatprep.subr.bf16.mxu0 %v871
    %1138 = vmatpush1.bf16.msra.mxu0 %v870
    %1139 = vmatprep.subr.bf16.mxu0 %v873
    %1140 = vmatpush1.bf16.msra.mxu0 %v872
    %1141 = vmatprep.mubr.bf16.mxu0 %v281
    %1142 = vmatmul.mubr.bf16.gmra.mrb[0].mxu0 %v280
    %v1143 = vpop.f32.mrb[0].mxu0
    %v1144 = vadd.f32 %v1101, %v1143
    %v1145 = vpop.f32.mrb[0].mxu0
    %v1146 = vadd.f32 %v1103, %v1145
    %v1147 = vpop.f32.mrb[0].mxu0
    %v1148 = vadd.f32 %v1105, %v1147
    %v1149 = vpop.f32.mrb[0].mxu0
    %v1150 = vadd.f32 %v1107, %v1149
    %1151 = vdwg.mxu0
    %1152 = vmatprep.subr.bf16.mxu0 %v875
    %1153 = vmatpush1.bf16.msra.mxu0 %v874
    %1154 = vmatprep.subr.bf16.mxu0 %v877
    %1155 = vmatpush1.bf16.msra.mxu0 %v876
    %1156 = vmatprep.subr.bf16.mxu0 %v879
    %1157 = vmatpush1.bf16.msra.mxu0 %v878
    %1158 = vmatprep.subr.bf16.mxu0 %v881
    %1159 = vmatpush1.bf16.msra.mxu0 %v880
    %1160 = vmatprep.subr.bf16.mxu0 %v883
    %1161 = vmatpush1.bf16.msra.mxu0 %v882
    %1162 = vmatprep.subr.bf16.mxu0 %v885
    %1163 = vmatpush1.bf16.msra.mxu0 %v884
    %1164 = vmatprep.subr.bf16.mxu0 %v887
    %1165 = vmatpush1.bf16.msra.mxu0 %v886
    %1166 = vmatprep.subr.bf16.mxu0 %v889
    %1167 = vmatpush1.bf16.msra.mxu0 %v888
    %1168 = vmatprep.subr.bf16.mxu0 %v891
    %1169 = vmatpush1.bf16.msra.mxu0 %v890
    %1170 = vmatprep.subr.bf16.mxu0 %v893
    %1171 = vmatpush1.bf16.msra.mxu0 %v892
    %1172 = vmatprep.subr.bf16.mxu0 %v895
    %1173 = vmatpush1.bf16.msra.mxu0 %v894
    %1174 = vmatprep.subr.bf16.mxu0 %v897
    %1175 = vmatpush1.bf16.msra.mxu0 %v896
    %1176 = vmatprep.subr.bf16.mxu0 %v899
    %1177 = vmatpush1.bf16.msra.mxu0 %v898
    %1178 = vmatprep.subr.bf16.mxu0 %v901
    %1179 = vmatpush1.bf16.msra.mxu0 %v900
    %1180 = vmatprep.subr.bf16.mxu0 %v903
    %1181 = vmatpush1.bf16.msra.mxu0 %v902
    %1182 = vmatprep.subr.bf16.mxu0 %v905
    %1183 = vmatpush1.bf16.msra.mxu0 %v904
    %1184 = vmatprep.mubr.bf16.mxu0 %v283
    %1185 = vmatmul.mubr.bf16.gmra.mrb[0].mxu0 %v282
    %v1186 = vpop.f32.mrb[0].mxu0
    %v1187 = vadd.f32 %v1144, %v1186
    %v1188 = vpop.f32.mrb[0].mxu0
    %v1189 = vadd.f32 %v1146, %v1188
    %v1190 = vpop.f32.mrb[0].mxu0
    %v1191 = vadd.f32 %v1148, %v1190
    %v1192 = vpop.f32.mrb[0].mxu0
    %v1193 = vadd.f32 %v1150, %v1192
    %1194 = vdwg.mxu0
    %1195 = vmatprep.subr.bf16.mxu0 %v907
    %1196 = vmatpush1.bf16.msra.mxu0 %v906
    %1197 = vmatprep.subr.bf16.mxu0 %v909
    %1198 = vmatpush1.bf16.msra.mxu0 %v908
    %1199 = vmatprep.subr.bf16.mxu0 %v911
    %1200 = vmatpush1.bf16.msra.mxu0 %v910
    %1201 = vmatprep.subr.bf16.mxu0 %v913
    %1202 = vmatpush1.bf16.msra.mxu0 %v912
    %1203 = vmatprep.subr.bf16.mxu0 %v915
    %1204 = vmatpush1.bf16.msra.mxu0 %v914
    %1205 = vmatprep.subr.bf16.mxu0 %v917
    %1206 = vmatpush1.bf16.msra.mxu0 %v916
    %1207 = vmatprep.subr.bf16.mxu0 %v919
    %1208 = vmatpush1.bf16.msra.mxu0 %v918
    %1209 = vmatprep.subr.bf16.mxu0 %v921
    %1210 = vmatpush1.bf16.msra.mxu0 %v920
    %1211 = vmatprep.subr.bf16.mxu0 %v923
    %1212 = vmatpush1.bf16.msra.mxu0 %v922
    %1213 = vmatprep.subr.bf16.mxu0 %v925
    %1214 = vmatpush1.bf16.msra.mxu0 %v924
    %1215 = vmatprep.subr.bf16.mxu0 %v927
    %1216 = vmatpush1.bf16.msra.mxu0 %v926
    %1217 = vmatprep.subr.bf16.mxu0 %v929
    %1218 = vmatpush1.bf16.msra.mxu0 %v928
    %1219 = vmatprep.subr.bf16.mxu0 %v931
    %1220 = vmatpush1.bf16.msra.mxu0 %v930
    %1221 = vmatprep.subr.bf16.mxu0 %v933
    %1222 = vmatpush1.bf16.msra.mxu0 %v932
    %1223 = vmatprep.subr.bf16.mxu0 %v935
    %1224 = vmatpush1.bf16.msra.mxu0 %v934
    %1225 = vmatprep.subr.bf16.mxu0 %v937
    %1226 = vmatpush1.bf16.msra.mxu0 %v936
    %1227 = vmatprep.mubr.bf16.mxu0 %v285
    %1228 = vmatmul.mubr.bf16.gmra.mrb[0].mxu0 %v284
    %v1229 = vpop.f32.mrb[0].mxu0
    %v1230 = vadd.f32 %v1187, %v1229
    %v1231 = vpop.f32.mrb[0].mxu0
    %v1232 = vadd.f32 %v1189, %v1231
    %v1233 = vpop.f32.mrb[0].mxu0
    %v1234 = vadd.f32 %v1191, %v1233
    %v1235 = vpop.f32.mrb[0].mxu0
    %v1236 = vadd.f32 %v1193, %v1235
    %1237 = vdwg.mxu0
    %v1238 = vmax.f32 %v1230, 0.0
    %v1239 = vmax.f32 %v1232, 0.0
    %v1240 = vmax.f32 %v1234, 0.0
    %v1241 = vmax.f32 %v1236, 0.0
    %v1242 = vpack.c.bf16 %v1240, %v1238
    %v1243 = vpack.c.bf16 %v1241, %v1239
    %v1244 = vld [vmem:[#allocation8] sm:$0xf]
    %v1245 = vld [vmem:[#allocation8 + $0x4] sm:$0xf]
    %v1246 = vld [vmem:[#allocation8 + $0x8] sm:$0xf]
    %v1247 = vld [vmem:[#allocation8 + $0xc] sm:$0xf]
    %v1248 = vld [vmem:[#allocation8 + $0x10] sm:$0xf]
    %v1249 = vld [vmem:[#allocation8 + $0x14] sm:$0xf]
    %v1250 = vld [vmem:[#allocation8 + $0x18] sm:$0xf]
    %v1251 = vld [vmem:[#allocation8 + $0x1c] sm:$0xf]
    %v1252 = vld [vmem:[#allocation8 + $0x20] sm:$0xf]
    %v1253 = vld [vmem:[#allocation8 + $0x24] sm:$0xf]
    %v1254 = vld [vmem:[#allocation8 + $0x28] sm:$0xf]
    %v1255 = vld [vmem:[#allocation8 + $0x2c] sm:$0xf]
    %v1256 = vld [vmem:[#allocation8 + $0x30] sm:$0xf]
    %v1257 = vld [vmem:[#allocation8 + $0x34] sm:$0xf]
    %v1258 = vld [vmem:[#allocation8 + $0x38] sm:$0xf]
    %v1259 = vld [vmem:[#allocation8 + $0x3c] sm:$0xf]
    %v1260 = vld [vmem:[#allocation8 + $0x40] sm:$0xf]
    %v1261 = vld [vmem:[#allocation8 + $0x44] sm:$0xf]
    %v1262 = vld [vmem:[#allocation8 + $0x48] sm:$0xf]
    %v1263 = vld [vmem:[#allocation8 + $0x4c] sm:$0xf]
    %v1264 = vld [vmem:[#allocation8 + $0x50] sm:$0xf]
    %v1265 = vld [vmem:[#allocation8 + $0x54] sm:$0xf]
    %v1266 = vld [vmem:[#allocation8 + $0x58] sm:$0xf]
    %v1267 = vld [vmem:[#allocation8 + $0x5c] sm:$0xf]
    %v1268 = vld [vmem:[#allocation8 + $0x60] sm:$0xf]
    %v1269 = vld [vmem:[#allocation8 + $0x64] sm:$0xf]
    %v1270 = vld [vmem:[#allocation8 + $0x68] sm:$0xf]
    %v1271 = vld [vmem:[#allocation8 + $0x6c] sm:$0xf]
    %v1272 = vld [vmem:[#allocation8 + $0x70] sm:$0xf]
    %v1273 = vld [vmem:[#allocation8 + $0x74] sm:$0xf]
    %v1274 = vld [vmem:[#allocation8 + $0x78] sm:$0xf]
    %v1275 = vld [vmem:[#allocation8 + $0x7c] sm:$0xf]
    %v1276 = vld [vmem:[#allocation10] sm:$0x1]
    %v1278 = vlaneseq
    %v1279 = vshrl.u32 %v1278, 7
    %v1280 = vsub.s32 0, %v1279
    %v1281 = vrot.slane %v1276, %v1280
    %v1315 = vunpack.c.l.b16 %v1244
    %v1316 = vunpack.c.l.b16 %v1245
    %v1317 = vunpack.c.l.b16 %v1246
    %v1318 = vunpack.c.l.b16 %v1247
    %v1319 = vunpack.c.l.b16 %v1248
    %v1320 = vunpack.c.l.b16 %v1249
    %v1321 = vunpack.c.l.b16 %v1250
    %v1322 = vunpack.c.l.b16 %v1251
    %v1323 = vunpack.c.l.b16 %v1252
    %v1324 = vunpack.c.l.b16 %v1253
    %v1325 = vunpack.c.l.b16 %v1254
    %v1326 = vunpack.c.l.b16 %v1255
    %v1327 = vunpack.c.l.b16 %v1256
    %v1328 = vunpack.c.l.b16 %v1257
    %v1329 = vunpack.c.l.b16 %v1258
    %v1330 = vunpack.c.l.b16 %v1259
    %v1331 = vunpack.c.l.b16 %v1260
    %v1332 = vunpack.c.l.b16 %v1261
    %v1333 = vunpack.c.l.b16 %v1262
    %v1334 = vunpack.c.l.b16 %v1263
    %v1335 = vunpack.c.l.b16 %v1264
    %v1336 = vunpack.c.l.b16 %v1265
    %v1337 = vunpack.c.l.b16 %v1266
    %v1338 = vunpack.c.l.b16 %v1267
    %v1339 = vunpack.c.l.b16 %v1268
    %v1340 = vunpack.c.l.b16 %v1269
    %v1341 = vunpack.c.l.b16 %v1270
    %v1342 = vunpack.c.l.b16 %v1271
    %v1343 = vunpack.c.l.b16 %v1272
    %v1344 = vunpack.c.l.b16 %v1273
    %v1345 = vunpack.c.l.b16 %v1274
    %v1346 = vunpack.c.l.b16 %v1275
    %v1347 = vpack.c.b16 %v1316, %v1315
    %v1348 = vpack.c.b16 %v1318, %v1317
    %v1349 = vpack.c.b16 %v1320, %v1319
    %v1350 = vpack.c.b16 %v1322, %v1321
    %v1351 = vpack.c.b16 %v1324, %v1323
    %v1352 = vpack.c.b16 %v1326, %v1325
    %v1353 = vpack.c.b16 %v1328, %v1327
    %v1354 = vpack.c.b16 %v1330, %v1329
    %v1355 = vpack.c.b16 %v1332, %v1331
    %v1356 = vpack.c.b16 %v1334, %v1333
    %v1357 = vpack.c.b16 %v1336, %v1335
    %v1358 = vpack.c.b16 %v1338, %v1337
    %v1359 = vpack.c.b16 %v1340, %v1339
    %v1360 = vpack.c.b16 %v1342, %v1341
    %v1361 = vpack.c.b16 %v1344, %v1343
    %v1362 = vpack.c.b16 %v1346, %v1345
    %1379 = vmatprep.subr.bf16.mxu0 0
    %1380 = vmatpush1.bf16.msra.mxu0 %v1347
    %1381 = vmatprep.subr.bf16.mxu0 0
    %1382 = vmatpush1.bf16.msra.mxu0 %v1348
    %1383 = vmatprep.subr.bf16.mxu0 0
    %1384 = vmatpush1.bf16.msra.mxu0 %v1349
    %1385 = vmatprep.subr.bf16.mxu0 0
    %1386 = vmatpush1.bf16.msra.mxu0 %v1350
    %1387 = vmatprep.subr.bf16.mxu0 0
    %1388 = vmatpush1.bf16.msra.mxu0 %v1351
    %1389 = vmatprep.subr.bf16.mxu0 0
    %1390 = vmatpush1.bf16.msra.mxu0 %v1352
    %1391 = vmatprep.subr.bf16.mxu0 0
    %1392 = vmatpush1.bf16.msra.mxu0 %v1353
    %1393 = vmatprep.subr.bf16.mxu0 0
    %1394 = vmatpush1.bf16.msra.mxu0 %v1354
    %1395 = vmatprep.subr.bf16.mxu0 0
    %1396 = vmatpush1.bf16.msra.mxu0 %v1355
    %1397 = vmatprep.subr.bf16.mxu0 0
    %1398 = vmatpush1.bf16.msra.mxu0 %v1356
    %1399 = vmatprep.subr.bf16.mxu0 0
    %1400 = vmatpush1.bf16.msra.mxu0 %v1357
    %1401 = vmatprep.subr.bf16.mxu0 0
    %1402 = vmatpush1.bf16.msra.mxu0 %v1358
    %1403 = vmatprep.subr.bf16.mxu0 0
    %1404 = vmatpush1.bf16.msra.mxu0 %v1359
    %1405 = vmatprep.subr.bf16.mxu0 0
    %1406 = vmatpush1.bf16.msra.mxu0 %v1360
    %1407 = vmatprep.subr.bf16.mxu0 0
    %1408 = vmatpush1.bf16.msra.mxu0 %v1361
    %1409 = vmatprep.subr.bf16.mxu0 0
    %1410 = vmatpush1.bf16.msra.mxu0 %v1362
    %1411 = vmatprep.mubr.bf16.mxu0 %v1243
    %1412 = vmatmul.mubr.bf16.gmra.mrb[0].mxu0 %v1242
    %v1413 = vpop.f32.mrb[0].mxu0
    %v1414 = vadd.f32 %v1281, %v1413
    %v1415 = vpop.f32.mrb[0].mxu0
    %v1416 = vpop.f32.mrb[0].mxu0
    %v1417 = vadd.f32 %v1281, %v1416
    %v1418 = vpop.f32.mrb[0].mxu0
    %1419 = vdwg.mxu0
    %v1420 = vmul.f32 %v1414, %v1414
    %v1421 = vmul.f32 %v1417, %v1417
    %1422 = vadd.xlane.f32.xlu0 %v1420
    %v1423 = vpop.xlane.xlu0 %1422
    %1424 = vadd.xlane.f32.xlu0 %v1421
    %v1425 = vpop.xlane.xlu0 %1424
    %v1426 = vmul.f32 %v1423, 0.015625
    %v1427 = vmul.f32 %v1425, 0.015625
    %vm1428 = vcmask 7168
    %1429 = vst.msk [vmem:[#allocation11] sm:$0xff] %vm1428, %v1426
    %1430 = vst.msk [vmem:[#allocation11 + $0x8] sm:$0xff] %vm1428, %v1427
    // Predicated region
    $region42: #{tpu_custom_call.1} parent=1 // pred_check
      _
    $region43: #{tpu_custom_call.1} parent=1 // pred_check_branch
      %1432 = sbr.rel (0) target = $region45
    $region44: #{tpu_custom_call.1} parent=1 // pred_region
      %s1434 = ssub.s32 256, 32
      %1435 = vsyncadd [#allocation4], %s1434
      %s1436 = sshll.u32 [#allocation11], 4
      %s1437 = int_to_ptr.vmem [resolvable:$true] %s1436
      %1442 = dma.vmem_to_hbm [thread:$0]  %s1437, 32, %s5, [#allocation4], 32, 32, 2
    $region45: #{tpu_custom_call.1} parent=1 // pred_fallthru
      _
    // Predicated region
    $region46: #{tpu_custom_call.1} parent=1 // pred_check
      _
    $region47: #{tpu_custom_call.1} parent=1 // pred_check_branch
      %1444 = sbr.rel (0) target = $region49
    $region48: #{tpu_custom_call.1} parent=1 // pred_region
      %1445 = dma.done [#allocation4], 256
    $region49: #{tpu_custom_call.1} parent=1 // pred_fallthru
      _
    %1446 = vsyncpa [#allocation3], 1
    %1447 = vsyncpa [#allocation6], 1
    %1448 = vsyncpa [#allocation9], 1
    %1449 = vsyncpa [#allocation4], 1

</llo_original>
